<compile_context>
chip_gen: v7x
topology: tpu7x:2x2x1
jax: 0.10.0
libtpu: 0.0.40
codegen_flags: <defaults>
</compile_context>

<pallas_src>
import math

import jax
import jax.numpy as jnp
from jax.experimental import pallas as pl
from jax.experimental.pallas import tpu as pltpu


def _round_up(a: int, b: int) -> int:
    return -(-a // b) * b


def _mxu_contraction_lanes() -> int:
    """K to fill per MXU pass: 256 on v6e/v7x, 128 on v2-v5 (and unknown chips)."""
    try:
        kind = jax.devices()[0].device_kind.lower()
    except Exception:
        return 128
    for tag in ("v2", "v3", "v4", "v5"):
        if tag in kind:
            return 128
    if ("v6" in kind) or ("v7" in kind):
        return 256
    return 128


def _mlp_kernel(x_ref, w1_ref, b1_ref, w2_ref, b2_ref, o_ref):
    # x_ref:  (R, PACK)      caller dtype (f32 or bf16), PACK = P*sz lanes
    # w1_ref: (PACK, P*hid)  bf16, block-diagonal replicated W1   (VMEM-resident)
    # b1_ref: (1, P*hid)     f32, P-tiled b1                      (VMEM-resident)
    # w2_ref: (P*hid, P)     bf16, block-diagonal replicated W2   (VMEM-resident)
    # b2_ref: (1,)           f32 scalar in SMEM
    # o_ref:  (R, P)         f32
    x = x_ref[...].astype(jnp.bfloat16)              # in-kernel cast (no-op for bf16 callers)
    h = jnp.dot(x, w1_ref[...], preferred_element_type=jnp.float32)     # (R, P*hid) on MXU
    h = jnp.maximum(h + b1_ref[...], 0.0)            # bias + ReLU in f32 (v5e-safe VPU math)
    y = jnp.dot(h.astype(jnp.bfloat16), w2_ref[...],
                preferred_element_type=jnp.float32)                      # (R, P) on MXU
    o_ref[...] = jnp.maximum(y + b2_ref[0], 0.0)      # final ReLU


def sequence_net_forward(x, w1, b1, w2, b2, sz, *,
                         pack_lanes=None, target_block_elems=512 * 1024):
    """Pallas equivalent of SequenceNet.forward.

    x:  any shape whose element count is a multiple of sz (torch x.view(-1, sz))
    w1: (sz, hid), b1: (hid,), w2: (hid, 1) or (hid,), b2: (1,)
    returns: (N, 1) float32 where N = x.size // sz
    """
    hid = w1.shape[1]
    total = x.size
    n = total // sz
    assert n * sz == total, "input element count must be a multiple of sz"

    # --- packing factor: P samples per 128/256-lane packed row ---
    if pack_lanes is None:
        pack_lanes = _mxu_contraction_lanes()
    if sz >= pack_lanes:
        p = 1                                        # feature dim already lane-sized
    else:
        p = pack_lanes // math.gcd(sz, pack_lanes)   # smallest P with P*sz % pack_lanes == 0
    pack = p * sz

    # --- lane-dense repack: contiguous samples viewed as (n_rows, pack) ---
    flat = jnp.ravel(x)                              # metadata-only for contiguous input
    n_rows = pl.cdiv(total, pack)
    if n_rows * pack != total:
        # Only when n % P != 0: zero-fill the ragged tail (< pack elements of payload).
        # TODO(synk): a separate tiny tail call would avoid this copy entirely.
        flat = jnp.pad(flat, (0, n_rows * pack - total))
    x2 = flat.reshape(n_rows, pack)                  # caller dtype; bf16 cast happens in-kernel

    # --- block-diagonal replicated weights (tiny, built once per call) ---
    eye = jnp.eye(p, dtype=jnp.float32)
    w1_blk = jnp.kron(eye, w1.astype(jnp.float32)).astype(jnp.bfloat16)            # (pack, p*hid)
    w2_blk = jnp.kron(eye, w2.astype(jnp.float32).reshape(hid, 1)).astype(jnp.bfloat16)  # (p*hid, p)
    b1_blk = jnp.tile(b1.astype(jnp.float32).reshape(1, hid), (1, p))               # (1, p*hid)
    b2_s = b2.reshape(1).astype(jnp.float32)                                        # SMEM scalar

    # --- row-block size: ~target_block_elems of x per step (≈2 MiB f32), multiple of 8
    #     rows, and at least 2 grid steps so both v7x TensorCores get work ---
    target_rows = max(8, _round_up(max(1, target_block_elems // pack), 8))
    if n_rows <= 16:
        block_rows = n_rows                          # single block == full extent (allowed)
    else:
        block_rows = min(target_rows, max(8, _round_up(pl.cdiv(n_rows, 2), 8)))
    grid = (pl.cdiv(n_rows, block_rows),)            # ragged last block handled by Pallas

    out = pl.pallas_call(
        _mlp_kernel,
        out_shape=jax.ShapeDtypeStruct((n_rows, p), jnp.float32),
        grid=grid,
        in_specs=[
            pl.BlockSpec((block_rows, pack), lambda i: (i, 0)),      # x: lane-dense row tiles
            pl.BlockSpec((pack, p * hid), lambda i: (0, 0)),         # W1 blk-diag: VMEM-resident
            pl.BlockSpec((1, p * hid), lambda i: (0, 0)),            # b1 tiled:    VMEM-resident
            pl.BlockSpec((p * hid, p), lambda i: (0, 0)),            # W2 blk-diag: VMEM-resident
            pl.BlockSpec(memory_space=pltpu.MemorySpace.SMEM),       # b2 scalar
        ],
        out_specs=pl.BlockSpec((block_rows, p), lambda i: (i, 0)),
        compiler_params=pltpu.CompilerParams(
            dimension_semantics=("parallel",),                       # megacore split on v7x
            vmem_limit_bytes=40 * 1024 * 1024,                       # ~24 MiB used; <64 MiB v7x
        ),
    )(x2, w1_blk, b1_blk, w2_blk, b2_s)

    y = out.reshape(n_rows * p, 1)                   # metadata-only flatten to sample order
    return y[:n] if n_rows * p != n else y


def init_params(key, sz, hid):
    """Deterministic init mimicking PyTorch Linear default U(-1/sqrt(fan_in), 1/sqrt(fan_in))."""
    k1, k2, k3, k4 = jax.random.split(key, 4)
    bound1 = 1.0 / (sz ** 0.5)
    bound2 = 1.0 / (hid ** 0.5)
    # Stored as (in, out); the wrapper builds the block-diagonal/transposed forms.
    w1 = jax.random.uniform(k1, (sz, hid), jnp.float32, -bound1, bound1)
    b1 = jax.random.uniform(k2, (hid,), jnp.float32, -bound1, bound1)
    w2 = jax.random.uniform(k3, (hid, 1), jnp.float32, -bound2, bound2)
    b2 = jax.random.uniform(k4, (1,), jnp.float32, -bound2, bound2)
    return w1, b1, w2, b2


if __name__ == "__main__":
    # TODO(synk): SequenceNet.load/save (torch state-dict file I/O) has no kernel equivalent.
    sz = 8      # input feature size (SequenceNet sz)
    hid = 32    # hidden size (SequenceNet hid)

    key = jax.random.PRNGKey(0)
    kx, kp, kx2 = jax.random.split(key, 3)
    w1, b1, w2, b2 = init_params(kp, sz, hid)

    HI = jax.lax.Precision.HIGHEST

    def reference_f32(xa):
        xr = xa.reshape(-1, sz).astype(jnp.float32)
        h = jnp.maximum(jnp.dot(xr, w1, precision=HI) + b1, 0.0)
        return jnp.maximum(jnp.dot(h, w2, precision=HI) + b2, 0.0)

    def reference_bf16(xa):
        # Mirrors the kernel's MXU feed: x, W1, hidden, W2 in bf16; accum/bias/ReLU in f32.
        xq = xa.reshape(-1, sz).astype(jnp.bfloat16).astype(jnp.float32)
        w1q = w1.astype(jnp.bfloat16).astype(jnp.float32)
        h = jnp.maximum(jnp.dot(xq, w1q, precision=HI) + b1, 0.0)
        hq = h.astype(jnp.bfloat16).astype(jnp.float32)
        w2q = w2.astype(jnp.bfloat16).astype(jnp.float32)
        return jnp.maximum(jnp.dot(hq, w2q, precision=HI) + b2, 0.0)

    # 1) Tiny batch (ragged sub-pack tail): (2, 4, 8) -> view(-1, 8) = (8, 8)
    x_small = jax.random.normal(kx, (2, 4, sz), jnp.float32)
    y_small = jax.block_until_ready(sequence_net_forward(x_small, w1, b1, w2, b2, sz))
    assert y_small.shape == (8, 1)
    assert jnp.allclose(y_small, reference_bf16(x_small), atol=1e-3, rtol=1e-3), \
        "mismatch vs bf16-matched reference (small)"
    assert jnp.allclose(y_small, reference_f32(x_small), atol=5e-2), \
        "mismatch vs f32 reference beyond bf16 tolerance (small)"

    # 2) Medium batch (multi-step grid + ragged last block): (125, 8, 8) -> (1000, 8)
    x_med = jax.random.normal(kx2, (125, 8, sz), jnp.float32)
    y_med = jax.block_until_ready(sequence_net_forward(x_med, w1, b1, w2, b2, sz))
    assert y_med.shape == (1000, 1)
    assert jnp.allclose(y_med, reference_bf16(x_med), atol=1e-3, rtol=1e-3), \
        "mismatch vs bf16-matched reference (medium)"
    assert jnp.allclose(y_med, reference_f32(x_med), atol=5e-2), \
        "mismatch vs f32 reference beyond bf16 tolerance (medium)"

    print("KERNEL_OK")
</pallas_src>

<mosaic_0001>
module attributes {stable_mosaic.version = 11 : i64} {
  func.func @_mlp_kernel(%arg0: i32, %arg1: memref<1x128xf32, #tpu.memory_space<vmem>>, %arg2: memref<128x512xbf16, #tpu.memory_space<vmem>>, %arg3: memref<1x512xf32, #tpu.memory_space<vmem>>, %arg4: memref<512x16xbf16, #tpu.memory_space<vmem>>, %arg5: memref<1xf32, #tpu.memory_space<smem>>, %arg6: memref<1x16xf32, #tpu.memory_space<vmem>>) attributes {dimension_semantics = [#tpu.dimension_semantics<parallel>], iteration_bounds = array<i64: 1>, scalar_prefetch = 0 : i64, scratch_operands = 0 : i64, tpu.core_type = #tpu.core_type<tc>, window_params = [{transform_indices = @transform_0, window_bounds = array<i64: 1, 128>}, {pipeline_mode = #tpu.pipeline_mode<synchronous>, transform_indices = @transform_1, window_bounds = array<i64: 128, 512>}, {pipeline_mode = #tpu.pipeline_mode<synchronous>, transform_indices = @transform_2, window_bounds = array<i64: 1, 512>}, {pipeline_mode = #tpu.pipeline_mode<synchronous>, transform_indices = @transform_3, window_bounds = array<i64: 512, 16>}, {transform_indices = @transform_4, window_bounds = array<i64: 1>}, {transform_indices = @transform_5, window_bounds = array<i64: 1, 16>}]} {
    %c0 = arith.constant 0 : index
    %c0_0 = arith.constant 0 : index
    %0 = vector.load %arg1[%c0, %c0_0] : memref<1x128xf32, #tpu.memory_space<vmem>>, vector<1x128xf32>
    %1 = arith.truncf %0 : vector<1x128xf32> to vector<1x128xbf16>
    %c0_1 = arith.constant 0 : index
    %c0_2 = arith.constant 0 : index
    %2 = vector.load %arg2[%c0_1, %c0_2] : memref<128x512xbf16, #tpu.memory_space<vmem>>, vector<128x512xbf16>
    %cst = arith.constant dense<0.000000e+00> : vector<1x512xf32>
    %3 = tpu.matmul %1, %2, %cst {dimension_numbers = #tpu.dot_dimension_numbers<[1], [0], [0], [1], [0, 0, 1, 1], [], []>} : vector<1x128xbf16>, vector<128x512xbf16>, vector<1x512xf32> -> vector<1x512xf32>
    %c0_3 = arith.constant 0 : index
    %c0_4 = arith.constant 0 : index
    %4 = vector.load %arg3[%c0_3, %c0_4] : memref<1x512xf32, #tpu.memory_space<vmem>>, vector<1x512xf32>
    %5 = arith.addf %3, %4 : vector<1x512xf32>
    %cst_5 = arith.constant 0.000000e+00 : f32
    %6 = vector.broadcast %cst_5 : f32 to vector<1x512xf32>
    %7 = arith.maximumf %5, %6 : vector<1x512xf32>
    %8 = arith.truncf %7 : vector<1x512xf32> to vector<1x512xbf16>
    %c0_6 = arith.constant 0 : index
    %c0_7 = arith.constant 0 : index
    %9 = vector.load %arg4[%c0_6, %c0_7] : memref<512x16xbf16, #tpu.memory_space<vmem>>, vector<512x16xbf16>
    %cst_8 = arith.constant dense<0.000000e+00> : vector<1x16xf32>
    %10 = tpu.matmul %8, %9, %cst_8 {dimension_numbers = #tpu.dot_dimension_numbers<[1], [0], [0], [1], [0, 0, 1, 1], [], []>} : vector<1x512xbf16>, vector<512x16xbf16>, vector<1x16xf32> -> vector<1x16xf32>
    %c0_9 = arith.constant 0 : index
    %11 = memref.load %arg5[%c0_9] : memref<1xf32, #tpu.memory_space<smem>>
    %12 = vector.broadcast %11 : f32 to vector<1x16xf32>
    %13 = arith.addf %10, %12 : vector<1x16xf32>
    %cst_10 = arith.constant 0.000000e+00 : f32
    %14 = vector.broadcast %cst_10 : f32 to vector<1x16xf32>
    %15 = arith.maximumf %13, %14 : vector<1x16xf32>
    %c0_11 = arith.constant 0 : index
    %c0_12 = arith.constant 0 : index
    %16 = vector.load %arg6[%c0_11, %c0_12] : memref<1x16xf32, #tpu.memory_space<vmem>>, vector<1x16xf32>
    tpu.vector_store %arg6[%c0_11, %c0_12], %15 {strides = array<i32>} : memref<1x16xf32, #tpu.memory_space<vmem>>, vector<1x16xf32>,
    return
  }
  func.func @transform_0(%arg0: i32) -> (i32, i32) {
    %c0_i32 = arith.constant 0 : i32
    %c0_i32_0 = arith.constant 0 : i32
    return %arg0, %c0_i32 : i32, i32
  }
  func.func @transform_1(%arg0: i32) -> (i32, i32) {
    %c0_i32 = arith.constant 0 : i32
    %c0_i32_0 = arith.constant 0 : i32
    %c0_i32_1 = arith.constant 0 : i32
    return %c0_i32, %c0_i32_0 : i32, i32
  }
  func.func @transform_2(%arg0: i32) -> (i32, i32) {
    %c0_i32 = arith.constant 0 : i32
    %c0_i32_0 = arith.constant 0 : i32
    %c0_i32_1 = arith.constant 0 : i32
    return %c0_i32, %c0_i32_0 : i32, i32
  }
  func.func @transform_3(%arg0: i32) -> (i32, i32) {
    %c0_i32 = arith.constant 0 : i32
    %c0_i32_0 = arith.constant 0 : i32
    %c0_i32_1 = arith.constant 0 : i32
    return %c0_i32, %c0_i32_0 : i32, i32
  }
  func.func @transform_4(%arg0: i32) -> i32 {
    %c0_i32 = arith.constant 0 : i32
    %c0_i32_0 = arith.constant 0 : i32
    return %c0_i32 : i32
  }
  func.func @transform_5(%arg0: i32) -> (i32, i32) {
    %c0_i32 = arith.constant 0 : i32
    %c0_i32_0 = arith.constant 0 : i32
    return %arg0, %c0_i32 : i32, i32
  }
}

</mosaic_0001>

<llo_original>
// kernel: tpu_custom_call.1
$region0: #{tpu_custom_call.1}
  #allocation0 [shape = 'u32[]', space=smem, size = 0x4, offset = 0x4, fixed_abs, tag = 'smem constant byte address 0x4 - core index']
  #allocation1 [shape = 'u32[144,128]{1,0:T(1,128)}', space=vmem, size = 0x12000, scoped, tag = 'internal scratch']
  #allocation2 [shape = 'f32[1]{0:T(128)S(6)}', space=smem, size = 0x200, scoped, tag = 'scoped memory for tpu_custom_call.1']
  %s0 = inlined_call_operand.vmem [shape: f32[1,128], index: 0, kind: input, shape index: {}]
  %s1 = inlined_call_operand.vmem [shape: bf16[128,512], index: 1, kind: input, shape index: {}]
  %s2 = inlined_call_operand.vmem [shape: f32[1,512], index: 2, kind: input, shape index: {}]
  %s3 = inlined_call_operand.vmem [shape: bf16[512,16], index: 3, kind: input, shape index: {}]
  %s4 = inlined_call_operand.<no memory space> [shape: f32[1], index: 4, kind: input, shape index: {}]
  %s5 = inlined_call_operand.hbm [shape: f32[1,16], index: 5, kind: output, shape index: {}]
  %s6 = sld [smem:[#allocation0]]
  $region30: #{tpu_custom_call.1} parent=0
    _
  %s8 = ssub.s32 1, %s6
  %s9 = scalar_select 0, %s8, %s6
  %10 = sst [smem:[#allocation2]] %s4
  $region1: #{tpu_custom_call.1} parent=0
    #allocation3 [shape = 'u8[512]{0}', space=vmem, size = 0x400, scoped, tag = 'output window, operand 0, single buffered']
    #allocation4 [shape = 's32[1]{0}', space=sflag, size = 0x4, scoped, tag = 'scoped memory for tpu_custom_call.1']
    %11 = vsyncpa [#allocation4], 0
    // Predicated region
    $region2: #{tpu_custom_call.1} parent=1 // pred_check
      _
    $region3: #{tpu_custom_call.1} parent=1 // pred_check_branch
      %13 = sbr.rel (0) target = $region5
    $region4: #{tpu_custom_call.1} parent=1 // pred_region
      _
    $region5: #{tpu_custom_call.1} parent=1 // pred_fallthru
      _
    // Predicated region
    $region6: #{tpu_custom_call.1} parent=1 // pred_check
      _
    $region7: #{tpu_custom_call.1} parent=1 // pred_check_branch
      %15 = sbr.rel (0) target = $region9
    $region8: #{tpu_custom_call.1} parent=1 // pred_region
      _
    $region9: #{tpu_custom_call.1} parent=1 // pred_fallthru
      _
    // Predicated region
    $region10: #{tpu_custom_call.1} parent=1 // pred_check
      _
    $region11: #{tpu_custom_call.1} parent=1 // pred_check_branch
      %17 = sbr.rel (0) target = $region13
    $region12: #{tpu_custom_call.1} parent=1 // pred_region
      _
    $region13: #{tpu_custom_call.1} parent=1 // pred_fallthru
      _
    // Predicated region
    $region14: #{tpu_custom_call.1} parent=1 // pred_check
      _
    $region15: #{tpu_custom_call.1} parent=1 // pred_check_branch
      %19 = sbr.rel (0) target = $region17
    $region16: #{tpu_custom_call.1} parent=1 // pred_region
      _
    $region17: #{tpu_custom_call.1} parent=1 // pred_fallthru
      _
    // Predicated region
    $region18: #{tpu_custom_call.1} parent=1 // pred_check
      _
    $region19: #{tpu_custom_call.1} parent=1 // pred_check_branch
      %21 = sbr.rel (0) target = $region21
    $region20: #{tpu_custom_call.1} parent=1 // pred_region
      _
    $region21: #{tpu_custom_call.1} parent=1 // pred_fallthru
      _
    %v23 = vld [vmem:[%s0] sm:$0x1]
    %v24 = vpack.c.bf16 %v23, %v23
    %v25 = vld [vmem:[%s1] sm:$0xff]
    %v26 = vld [vmem:[%s1 + $0x8] sm:$0xff]
    %v27 = vld [vmem:[%s1 + $0x10] sm:$0xff]
    %v28 = vld [vmem:[%s1 + $0x18] sm:$0xff]
    %v29 = vld [vmem:[%s1 + $0x20] sm:$0xff]
    %v30 = vld [vmem:[%s1 + $0x28] sm:$0xff]
    %v31 = vld [vmem:[%s1 + $0x30] sm:$0xff]
    %v32 = vld [vmem:[%s1 + $0x38] sm:$0xff]
    %v33 = vld [vmem:[%s1 + $0x40] sm:$0xff]
    %v34 = vld [vmem:[%s1 + $0x48] sm:$0xff]
    %v35 = vld [vmem:[%s1 + $0x50] sm:$0xff]
    %v36 = vld [vmem:[%s1 + $0x58] sm:$0xff]
    %v37 = vld [vmem:[%s1 + $0x60] sm:$0xff]
    %v38 = vld [vmem:[%s1 + $0x68] sm:$0xff]
    %v39 = vld [vmem:[%s1 + $0x70] sm:$0xff]
    %v40 = vld [vmem:[%s1 + $0x78] sm:$0xff]
    %v41 = vld [vmem:[%s1 + $0x80] sm:$0xff]
    %v42 = vld [vmem:[%s1 + $0x88] sm:$0xff]
    %v43 = vld [vmem:[%s1 + $0x90] sm:$0xff]
    %v44 = vld [vmem:[%s1 + $0x98] sm:$0xff]
    %v45 = vld [vmem:[%s1 + $0xa0] sm:$0xff]
    %v46 = vld [vmem:[%s1 + $0xa8] sm:$0xff]
    %v47 = vld [vmem:[%s1 + $0xb0] sm:$0xff]
    %v48 = vld [vmem:[%s1 + $0xb8] sm:$0xff]
    %v49 = vld [vmem:[%s1 + $0xc0] sm:$0xff]
    %v50 = vld [vmem:[%s1 + $0xc8] sm:$0xff]
    %v51 = vld [vmem:[%s1 + $0xd0] sm:$0xff]
    %v52 = vld [vmem:[%s1 + $0xd8] sm:$0xff]
    %v53 = vld [vmem:[%s1 + $0xe0] sm:$0xff]
    %v54 = vld [vmem:[%s1 + $0xe8] sm:$0xff]
    %v55 = vld [vmem:[%s1 + $0xf0] sm:$0xff]
    %v56 = vld [vmem:[%s1 + $0xf8] sm:$0xff]
    %v57 = vld [vmem:[%s2] sm:$0xf]
    %v90 = vunpack.c.l.b16 %v25
    %v91 = vunpack.c.h.b16 %v25
    %v92 = vunpack.c.l.b16 %v26
    %v93 = vunpack.c.h.b16 %v26
    %v94 = vunpack.c.l.b16 %v27
    %v95 = vunpack.c.h.b16 %v27
    %v96 = vunpack.c.l.b16 %v28
    %v97 = vunpack.c.h.b16 %v28
    %v98 = vunpack.c.l.b16 %v29
    %v99 = vunpack.c.h.b16 %v29
    %v100 = vunpack.c.l.b16 %v30
    %v101 = vunpack.c.h.b16 %v30
    %v102 = vunpack.c.l.b16 %v31
    %v103 = vunpack.c.h.b16 %v31
    %v104 = vunpack.c.l.b16 %v32
    %v105 = vunpack.c.h.b16 %v32
    %v106 = vunpack.c.l.b16 %v33
    %v107 = vunpack.c.h.b16 %v33
    %v108 = vunpack.c.l.b16 %v34
    %v109 = vunpack.c.h.b16 %v34
    %v110 = vunpack.c.l.b16 %v35
    %v111 = vunpack.c.h.b16 %v35
    %v112 = vunpack.c.l.b16 %v36
    %v113 = vunpack.c.h.b16 %v36
    %v114 = vunpack.c.l.b16 %v37
    %v115 = vunpack.c.h.b16 %v37
    %v116 = vunpack.c.l.b16 %v38
    %v117 = vunpack.c.h.b16 %v38
    %v118 = vunpack.c.l.b16 %v39
    %v119 = vunpack.c.h.b16 %v39
    %v120 = vunpack.c.l.b16 %v40
    %v121 = vunpack.c.h.b16 %v40
    %v122 = vunpack.c.l.b16 %v41
    %v123 = vunpack.c.h.b16 %v41
    %v124 = vunpack.c.l.b16 %v42
    %v125 = vunpack.c.h.b16 %v42
    %v126 = vunpack.c.l.b16 %v43
    %v127 = vunpack.c.h.b16 %v43
    %v128 = vunpack.c.l.b16 %v44
    %v129 = vunpack.c.h.b16 %v44
    %v130 = vunpack.c.l.b16 %v45
    %v131 = vunpack.c.h.b16 %v45
    %v132 = vunpack.c.l.b16 %v46
    %v133 = vunpack.c.h.b16 %v46
    %v134 = vunpack.c.l.b16 %v47
    %v135 = vunpack.c.h.b16 %v47
    %v136 = vunpack.c.l.b16 %v48
    %v137 = vunpack.c.h.b16 %v48
    %v138 = vunpack.c.l.b16 %v49
    %v139 = vunpack.c.h.b16 %v49
    %v140 = vunpack.c.l.b16 %v50
    %v141 = vunpack.c.h.b16 %v50
    %v142 = vunpack.c.l.b16 %v51
    %v143 = vunpack.c.h.b16 %v51
    %v144 = vunpack.c.l.b16 %v52
    %v145 = vunpack.c.h.b16 %v52
    %v146 = vunpack.c.l.b16 %v53
    %v147 = vunpack.c.h.b16 %v53
    %v148 = vunpack.c.l.b16 %v54
    %v149 = vunpack.c.h.b16 %v54
    %v150 = vunpack.c.l.b16 %v55
    %v151 = vunpack.c.h.b16 %v55
    %v152 = vunpack.c.l.b16 %v56
    %v153 = vunpack.c.h.b16 %v56
    %v154 = vpack.c.b16 %v94, %v90
    %v155 = vpack.c.b16 %v95, %v91
    %v156 = vpack.c.b16 %v96, %v92
    %v157 = vpack.c.b16 %v97, %v93
    %v158 = vpack.c.b16 %v102, %v98
    %v159 = vpack.c.b16 %v103, %v99
    %v160 = vpack.c.b16 %v104, %v100
    %v161 = vpack.c.b16 %v105, %v101
    %v162 = vpack.c.b16 %v110, %v106
    %v163 = vpack.c.b16 %v111, %v107
    %v164 = vpack.c.b16 %v112, %v108
    %v165 = vpack.c.b16 %v113, %v109
    %v166 = vpack.c.b16 %v118, %v114
    %v167 = vpack.c.b16 %v119, %v115
    %v168 = vpack.c.b16 %v120, %v116
    %v169 = vpack.c.b16 %v121, %v117
    %v170 = vpack.c.b16 %v126, %v122
    %v171 = vpack.c.b16 %v127, %v123
    %v172 = vpack.c.b16 %v128, %v124
    %v173 = vpack.c.b16 %v129, %v125
    %v174 = vpack.c.b16 %v134, %v130
    %v175 = vpack.c.b16 %v135, %v131
    %v176 = vpack.c.b16 %v136, %v132
    %v177 = vpack.c.b16 %v137, %v133
    %v178 = vpack.c.b16 %v142, %v138
    %v179 = vpack.c.b16 %v143, %v139
    %v180 = vpack.c.b16 %v144, %v140
    %v181 = vpack.c.b16 %v145, %v141
    %v182 = vpack.c.b16 %v150, %v146
    %v183 = vpack.c.b16 %v151, %v147
    %v184 = vpack.c.b16 %v152, %v148
    %v185 = vpack.c.b16 %v153, %v149
    %v219 = vlaneseq
    %v220 = vshrl.u32 %v219, 7
    %v221 = vsub.s32 0, %v220
    %v222 = vrot.slane %v57, %v221
    %v223 = vlaneseq
    %v224 = vshrl.u32 %v223, 7
    %v225 = vsub.s32 1, %v224
    %v226 = vrot.slane %v57, %v225
    %v227 = vlaneseq
    %v228 = vshrl.u32 %v227, 7
    %v229 = vsub.s32 2, %v228
    %v230 = vrot.slane %v57, %v229
    %v231 = vlaneseq
    %v232 = vshrl.u32 %v231, 7
    %v233 = vsub.s32 3, %v232
    %v234 = vrot.slane %v57, %v233
    %239 = vmatprep.subr.bf16.mxu0 %v155
    %240 = vmatpush1.bf16.msra.mxu0 %v154
    %241 = vmatprep.subr.bf16.mxu0 %v159
    %242 = vmatpush1.bf16.msra.mxu0 %v158
    %243 = vmatprep.subr.bf16.mxu0 %v163
    %244 = vmatpush1.bf16.msra.mxu0 %v162
    %245 = vmatprep.subr.bf16.mxu0 %v167
    %246 = vmatpush1.bf16.msra.mxu0 %v166
    %247 = vmatprep.subr.bf16.mxu0 %v171
    %248 = vmatpush1.bf16.msra.mxu0 %v170
    %249 = vmatprep.subr.bf16.mxu0 %v175
    %250 = vmatpush1.bf16.msra.mxu0 %v174
    %251 = vmatprep.subr.bf16.mxu0 %v179
    %252 = vmatpush1.bf16.msra.mxu0 %v178
    %253 = vmatprep.subr.bf16.mxu0 %v183
    %254 = vmatpush1.bf16.msra.mxu0 %v182
    %255 = vmatprep.subr.bf16.mxu0 0
    %256 = vmatpush1.bf16.msra.mxu0 0
    %257 = vmatprep.subr.bf16.mxu0 0
    %258 = vmatpush1.bf16.msra.mxu0 0
    %259 = vmatprep.subr.bf16.mxu0 0
    %260 = vmatpush1.bf16.msra.mxu0 0
    %261 = vmatprep.subr.bf16.mxu0 0
    %262 = vmatpush1.bf16.msra.mxu0 0
    %263 = vmatprep.subr.bf16.mxu0 0
    %264 = vmatpush1.bf16.msra.mxu0 0
    %265 = vmatprep.subr.bf16.mxu0 0
    %266 = vmatpush1.bf16.msra.mxu0 0
    %267 = vmatprep.subr.bf16.mxu0 0
    %268 = vmatpush1.bf16.msra.mxu0 0
    %269 = vmatprep.subr.bf16.mxu0 0
    %270 = vmatpush1.bf16.msra.mxu0 0
    %271 = vmatprep.mubr.bf16.mxu0 0
    %272 = vmatmul.mubr.bf16.gmra.mrb[0].mxu0 %v24
    %v273 = vpop.f32.mrb[0].mxu0
    %v274 = vadd.f32 %v222, %v273
    %v275 = vpop.f32.mrb[0].mxu0
    %v276 = vadd.f32 %v226, %v275
    %v277 = vpop.f32.mrb[0].mxu0
    %v278 = vpop.f32.mrb[0].mxu0
    %279 = vdwg.mxu0
    %280 = vmatprep.subr.bf16.mxu0 %v157
    %281 = vmatpush1.bf16.msra.mxu0 %v156
    %282 = vmatprep.subr.bf16.mxu0 %v161
    %283 = vmatpush1.bf16.msra.mxu0 %v160
    %284 = vmatprep.subr.bf16.mxu0 %v165
    %285 = vmatpush1.bf16.msra.mxu0 %v164
    %286 = vmatprep.subr.bf16.mxu0 %v169
    %287 = vmatpush1.bf16.msra.mxu0 %v168
    %288 = vmatprep.subr.bf16.mxu0 %v173
    %289 = vmatpush1.bf16.msra.mxu0 %v172
    %290 = vmatprep.subr.bf16.mxu0 %v177
    %291 = vmatpush1.bf16.msra.mxu0 %v176
    %292 = vmatprep.subr.bf16.mxu0 %v181
    %293 = vmatpush1.bf16.msra.mxu0 %v180
    %294 = vmatprep.subr.bf16.mxu0 %v185
    %295 = vmatpush1.bf16.msra.mxu0 %v184
    %296 = vmatprep.subr.bf16.mxu0 0
    %297 = vmatpush1.bf16.msra.mxu0 0
    %298 = vmatprep.subr.bf16.mxu0 0
    %299 = vmatpush1.bf16.msra.mxu0 0
    %300 = vmatprep.subr.bf16.mxu0 0
    %301 = vmatpush1.bf16.msra.mxu0 0
    %302 = vmatprep.subr.bf16.mxu0 0
    %303 = vmatpush1.bf16.msra.mxu0 0
    %304 = vmatprep.subr.bf16.mxu0 0
    %305 = vmatpush1.bf16.msra.mxu0 0
    %306 = vmatprep.subr.bf16.mxu0 0
    %307 = vmatpush1.bf16.msra.mxu0 0
    %308 = vmatprep.subr.bf16.mxu0 0
    %309 = vmatpush1.bf16.msra.mxu0 0
    %310 = vmatprep.subr.bf16.mxu0 0
    %311 = vmatpush1.bf16.msra.mxu0 0
    %312 = vmatprep.mubr.bf16.mxu0 0
    %313 = vmatmul.mubr.bf16.gmra.mrb[0].mxu0 %v24
    %v314 = vpop.f32.mrb[0].mxu0
    %v315 = vadd.f32 %v230, %v314
    %v316 = vpop.f32.mrb[0].mxu0
    %v317 = vadd.f32 %v234, %v316
    %v318 = vpop.f32.mrb[0].mxu0
    %v319 = vpop.f32.mrb[0].mxu0
    %320 = vdwg.mxu0
    %v321 = vmax.f32 %v274, 0.0
    %v322 = vmax.f32 %v276, 0.0
    %v323 = vmax.f32 %v315, 0.0
    %v324 = vmax.f32 %v317, 0.0
    %v325 = vpack.c.bf16 %v321, %v321
    %v326 = vpack.c.bf16 %v322, %v322
    %v327 = vpack.c.bf16 %v323, %v323
    %v328 = vpack.c.bf16 %v324, %v324
    %v329 = vld [vmem:[%s3] sm:$0xf]
    %v330 = vld [vmem:[%s3 + $0x4] sm:$0xf]
    %v331 = vld [vmem:[%s3 + $0x8] sm:$0xf]
    %v332 = vld [vmem:[%s3 + $0xc] sm:$0xf]
    %v333 = vld [vmem:[%s3 + $0x10] sm:$0xf]
    %v334 = vld [vmem:[%s3 + $0x14] sm:$0xf]
    %v335 = vld [vmem:[%s3 + $0x18] sm:$0xf]
    %v336 = vld [vmem:[%s3 + $0x1c] sm:$0xf]
    %v337 = vld [vmem:[%s3 + $0x20] sm:$0xf]
    %v338 = vld [vmem:[%s3 + $0x24] sm:$0xf]
    %v339 = vld [vmem:[%s3 + $0x28] sm:$0xf]
    %v340 = vld [vmem:[%s3 + $0x2c] sm:$0xf]
    %v341 = vld [vmem:[%s3 + $0x30] sm:$0xf]
    %v342 = vld [vmem:[%s3 + $0x34] sm:$0xf]
    %v343 = vld [vmem:[%s3 + $0x38] sm:$0xf]
    %v344 = vld [vmem:[%s3 + $0x3c] sm:$0xf]
    %v345 = vld [vmem:[%s3 + $0x40] sm:$0xf]
    %v346 = vld [vmem:[%s3 + $0x44] sm:$0xf]
    %v347 = vld [vmem:[%s3 + $0x48] sm:$0xf]
    %v348 = vld [vmem:[%s3 + $0x4c] sm:$0xf]
    %v349 = vld [vmem:[%s3 + $0x50] sm:$0xf]
    %v350 = vld [vmem:[%s3 + $0x54] sm:$0xf]
    %v351 = vld [vmem:[%s3 + $0x58] sm:$0xf]
    %v352 = vld [vmem:[%s3 + $0x5c] sm:$0xf]
    %v353 = vld [vmem:[%s3 + $0x60] sm:$0xf]
    %v354 = vld [vmem:[%s3 + $0x64] sm:$0xf]
    %v355 = vld [vmem:[%s3 + $0x68] sm:$0xf]
    %v356 = vld [vmem:[%s3 + $0x6c] sm:$0xf]
    %v357 = vld [vmem:[%s3 + $0x70] sm:$0xf]
    %v358 = vld [vmem:[%s3 + $0x74] sm:$0xf]
    %v359 = vld [vmem:[%s3 + $0x78] sm:$0xf]
    %v360 = vld [vmem:[%s3 + $0x7c] sm:$0xf]
    %v361 = vld [vmem:[%s3 + $0x80] sm:$0xf]
    %v362 = vld [vmem:[%s3 + $0x84] sm:$0xf]
    %v363 = vld [vmem:[%s3 + $0x88] sm:$0xf]
    %v364 = vld [vmem:[%s3 + $0x8c] sm:$0xf]
    %v365 = vld [vmem:[%s3 + $0x90] sm:$0xf]
    %v366 = vld [vmem:[%s3 + $0x94] sm:$0xf]
    %v367 = vld [vmem:[%s3 + $0x98] sm:$0xf]
    %v368 = vld [vmem:[%s3 + $0x9c] sm:$0xf]
    %v369 = vld [vmem:[%s3 + $0xa0] sm:$0xf]
    %v370 = vld [vmem:[%s3 + $0xa4] sm:$0xf]
    %v371 = vld [vmem:[%s3 + $0xa8] sm:$0xf]
    %v372 = vld [vmem:[%s3 + $0xac] sm:$0xf]
    %v373 = vld [vmem:[%s3 + $0xb0] sm:$0xf]
    %v374 = vld [vmem:[%s3 + $0xb4] sm:$0xf]
    %v375 = vld [vmem:[%s3 + $0xb8] sm:$0xf]
    %v376 = vld [vmem:[%s3 + $0xbc] sm:$0xf]
    %v377 = vld [vmem:[%s3 + $0xc0] sm:$0xf]
    %v378 = vld [vmem:[%s3 + $0xc4] sm:$0xf]
    %v379 = vld [vmem:[%s3 + $0xc8] sm:$0xf]
    %v380 = vld [vmem:[%s3 + $0xcc] sm:$0xf]
    %v381 = vld [vmem:[%s3 + $0xd0] sm:$0xf]
    %v382 = vld [vmem:[%s3 + $0xd4] sm:$0xf]
    %v383 = vld [vmem:[%s3 + $0xd8] sm:$0xf]
    %v384 = vld [vmem:[%s3 + $0xdc] sm:$0xf]
    %v385 = vld [vmem:[%s3 + $0xe0] sm:$0xf]
    %v386 = vld [vmem:[%s3 + $0xe4] sm:$0xf]
    %v387 = vld [vmem:[%s3 + $0xe8] sm:$0xf]
    %v388 = vld [vmem:[%s3 + $0xec] sm:$0xf]
    %v389 = vld [vmem:[%s3 + $0xf0] sm:$0xf]
    %v390 = vld [vmem:[%s3 + $0xf4] sm:$0xf]
    %v391 = vld [vmem:[%s3 + $0xf8] sm:$0xf]
    %v392 = vld [vmem:[%s3 + $0xfc] sm:$0xf]
    %s393 = sld [smem:[#allocation2]]
    %v394 = vstv %s393
    %v459 = vunpack.c.l.b16 %v329
    %v460 = vunpack.c.l.b16 %v330
    %v461 = vunpack.c.l.b16 %v331
    %v462 = vunpack.c.l.b16 %v332
    %v463 = vunpack.c.l.b16 %v333
    %v464 = vunpack.c.l.b16 %v334
    %v465 = vunpack.c.l.b16 %v335
    %v466 = vunpack.c.l.b16 %v336
    %v467 = vunpack.c.l.b16 %v337
    %v468 = vunpack.c.l.b16 %v338
    %v469 = vunpack.c.l.b16 %v339
    %v470 = vunpack.c.l.b16 %v340
    %v471 = vunpack.c.l.b16 %v341
    %v472 = vunpack.c.l.b16 %v342
    %v473 = vunpack.c.l.b16 %v343
    %v474 = vunpack.c.l.b16 %v344
    %v475 = vunpack.c.l.b16 %v345
    %v476 = vunpack.c.l.b16 %v346
    %v477 = vunpack.c.l.b16 %v347
    %v478 = vunpack.c.l.b16 %v348
    %v479 = vunpack.c.l.b16 %v349
    %v480 = vunpack.c.l.b16 %v350
    %v481 = vunpack.c.l.b16 %v351
    %v482 = vunpack.c.l.b16 %v352
    %v483 = vunpack.c.l.b16 %v353
    %v484 = vunpack.c.l.b16 %v354
    %v485 = vunpack.c.l.b16 %v355
    %v486 = vunpack.c.l.b16 %v356
    %v487 = vunpack.c.l.b16 %v357
    %v488 = vunpack.c.l.b16 %v358
    %v489 = vunpack.c.l.b16 %v359
    %v490 = vunpack.c.l.b16 %v360
    %v491 = vunpack.c.l.b16 %v361
    %v492 = vunpack.c.l.b16 %v362
    %v493 = vunpack.c.l.b16 %v363
    %v494 = vunpack.c.l.b16 %v364
    %v495 = vunpack.c.l.b16 %v365
    %v496 = vunpack.c.l.b16 %v366
    %v497 = vunpack.c.l.b16 %v367
    %v498 = vunpack.c.l.b16 %v368
    %v499 = vunpack.c.l.b16 %v369
    %v500 = vunpack.c.l.b16 %v370
    %v501 = vunpack.c.l.b16 %v371
    %v502 = vunpack.c.l.b16 %v372
    %v503 = vunpack.c.l.b16 %v373
    %v504 = vunpack.c.l.b16 %v374
    %v505 = vunpack.c.l.b16 %v375
    %v506 = vunpack.c.l.b16 %v376
    %v507 = vunpack.c.l.b16 %v377
    %v508 = vunpack.c.l.b16 %v378
    %v509 = vunpack.c.l.b16 %v379
    %v510 = vunpack.c.l.b16 %v380
    %v511 = vunpack.c.l.b16 %v381
    %v512 = vunpack.c.l.b16 %v382
    %v513 = vunpack.c.l.b16 %v383
    %v514 = vunpack.c.l.b16 %v384
    %v515 = vunpack.c.l.b16 %v385
    %v516 = vunpack.c.l.b16 %v386
    %v517 = vunpack.c.l.b16 %v387
    %v518 = vunpack.c.l.b16 %v388
    %v519 = vunpack.c.l.b16 %v389
    %v520 = vunpack.c.l.b16 %v390
    %v521 = vunpack.c.l.b16 %v391
    %v522 = vunpack.c.l.b16 %v392
    %v523 = vpack.c.b16 %v460, %v459
    %v524 = vpack.c.b16 %v462, %v461
    %v525 = vpack.c.b16 %v464, %v463
    %v526 = vpack.c.b16 %v466, %v465
    %v527 = vpack.c.b16 %v468, %v467
    %v528 = vpack.c.b16 %v470, %v469
    %v529 = vpack.c.b16 %v472, %v471
    %v530 = vpack.c.b16 %v474, %v473
    %v531 = vpack.c.b16 %v476, %v475
    %v532 = vpack.c.b16 %v478, %v477
    %v533 = vpack.c.b16 %v480, %v479
    %v534 = vpack.c.b16 %v482, %v481
    %v535 = vpack.c.b16 %v484, %v483
    %v536 = vpack.c.b16 %v486, %v485
    %v537 = vpack.c.b16 %v488, %v487
    %v538 = vpack.c.b16 %v490, %v489
    %v539 = vpack.c.b16 %v492, %v491
    %v540 = vpack.c.b16 %v494, %v493
    %v541 = vpack.c.b16 %v496, %v495
    %v542 = vpack.c.b16 %v498, %v497
    %v543 = vpack.c.b16 %v500, %v499
    %v544 = vpack.c.b16 %v502, %v501
    %v545 = vpack.c.b16 %v504, %v503
    %v546 = vpack.c.b16 %v506, %v505
    %v547 = vpack.c.b16 %v508, %v507
    %v548 = vpack.c.b16 %v510, %v509
    %v549 = vpack.c.b16 %v512, %v511
    %v550 = vpack.c.b16 %v514, %v513
    %v551 = vpack.c.b16 %v516, %v515
    %v552 = vpack.c.b16 %v518, %v517
    %v553 = vpack.c.b16 %v520, %v519
    %v554 = vpack.c.b16 %v522, %v521
    %587 = vmatprep.subr.bf16.mxu0 0
    %588 = vmatpush1.bf16.msra.mxu0 %v523
    %589 = vmatprep.subr.bf16.mxu0 0
    %590 = vmatpush1.bf16.msra.mxu0 %v524
    %591 = vmatprep.subr.bf16.mxu0 0
    %592 = vmatpush1.bf16.msra.mxu0 %v525
    %593 = vmatprep.subr.bf16.mxu0 0
    %594 = vmatpush1.bf16.msra.mxu0 %v526
    %595 = vmatprep.subr.bf16.mxu0 0
    %596 = vmatpush1.bf16.msra.mxu0 %v527
    %597 = vmatprep.subr.bf16.mxu0 0
    %598 = vmatpush1.bf16.msra.mxu0 %v528
    %599 = vmatprep.subr.bf16.mxu0 0
    %600 = vmatpush1.bf16.msra.mxu0 %v529
    %601 = vmatprep.subr.bf16.mxu0 0
    %602 = vmatpush1.bf16.msra.mxu0 %v530
    %603 = vmatprep.subr.bf16.mxu0 0
    %604 = vmatpush1.bf16.msra.mxu0 %v531
    %605 = vmatprep.subr.bf16.mxu0 0
    %606 = vmatpush1.bf16.msra.mxu0 %v532
    %607 = vmatprep.subr.bf16.mxu0 0
    %608 = vmatpush1.bf16.msra.mxu0 %v533
    %609 = vmatprep.subr.bf16.mxu0 0
    %610 = vmatpush1.bf16.msra.mxu0 %v534
    %611 = vmatprep.subr.bf16.mxu0 0
    %612 = vmatpush1.bf16.msra.mxu0 %v535
    %613 = vmatprep.subr.bf16.mxu0 0
    %614 = vmatpush1.bf16.msra.mxu0 %v536
    %615 = vmatprep.subr.bf16.mxu0 0
    %616 = vmatpush1.bf16.msra.mxu0 %v537
    %617 = vmatprep.subr.bf16.mxu0 0
    %618 = vmatpush1.bf16.msra.mxu0 %v538
    %619 = vmatprep.mubr.bf16.mxu0 %v326
    %620 = vmatmul.mubr.bf16.gmra.mrb[0].mxu0 %v325
    %v621 = vpop.f32.mrb[0].mxu0
    %v622 = vadd.f32 %v394, %v621
    %v623 = vpop.f32.mrb[0].mxu0
    %v624 = vpop.f32.mrb[0].mxu0
    %v625 = vpop.f32.mrb[0].mxu0
    %626 = vdwg.mxu0
    %627 = vmatprep.subr.bf16.mxu0 0
    %628 = vmatpush1.bf16.msra.mxu0 %v539
    %629 = vmatprep.subr.bf16.mxu0 0
    %630 = vmatpush1.bf16.msra.mxu0 %v540
    %631 = vmatprep.subr.bf16.mxu0 0
    %632 = vmatpush1.bf16.msra.mxu0 %v541
    %633 = vmatprep.subr.bf16.mxu0 0
    %634 = vmatpush1.bf16.msra.mxu0 %v542
    %635 = vmatprep.subr.bf16.mxu0 0
    %636 = vmatpush1.bf16.msra.mxu0 %v543
    %637 = vmatprep.subr.bf16.mxu0 0
    %638 = vmatpush1.bf16.msra.mxu0 %v544
    %639 = vmatprep.subr.bf16.mxu0 0
    %640 = vmatpush1.bf16.msra.mxu0 %v545
    %641 = vmatprep.subr.bf16.mxu0 0
    %642 = vmatpush1.bf16.msra.mxu0 %v546
    %643 = vmatprep.subr.bf16.mxu0 0
    %644 = vmatpush1.bf16.msra.mxu0 %v547
    %645 = vmatprep.subr.bf16.mxu0 0
    %646 = vmatpush1.bf16.msra.mxu0 %v548
    %647 = vmatprep.subr.bf16.mxu0 0
    %648 = vmatpush1.bf16.msra.mxu0 %v549
    %649 = vmatprep.subr.bf16.mxu0 0
    %650 = vmatpush1.bf16.msra.mxu0 %v550
    %651 = vmatprep.subr.bf16.mxu0 0
    %652 = vmatpush1.bf16.msra.mxu0 %v551
    %653 = vmatprep.subr.bf16.mxu0 0
    %654 = vmatpush1.bf16.msra.mxu0 %v552
    %655 = vmatprep.subr.bf16.mxu0 0
    %656 = vmatpush1.bf16.msra.mxu0 %v553
    %657 = vmatprep.subr.bf16.mxu0 0
    %658 = vmatpush1.bf16.msra.mxu0 %v554
    %659 = vmatprep.mubr.bf16.mxu0 %v328
    %660 = vmatmul.mubr.bf16.gmra.mrb[0].mxu0 %v327
    %v661 = vpop.f32.mrb[0].mxu0
    %v662 = vadd.f32 %v622, %v661
    %v663 = vpop.f32.mrb[0].mxu0
    %v664 = vpop.f32.mrb[0].mxu0
    %v665 = vpop.f32.mrb[0].mxu0
    %666 = vdwg.mxu0
    %v667 = vmax.f32 %v662, 0.0
    %vm668 = vcmask 122880
    %669 = vst.msk [vmem:[#allocation3] sm:$0x1] %vm668, %v667
    // Predicated region
    $region22: #{tpu_custom_call.1} parent=1 // pred_check
      _
    $region23: #{tpu_custom_call.1} parent=1 // pred_check_branch
      %671 = sbr.rel (0) target = $region25
    $region24: #{tpu_custom_call.1} parent=1 // pred_region
      %s673 = ssub.s32 16, 16
      %674 = vsyncadd [#allocation4], %s673
      %s676 = sshll.u32 [#allocation3], 4
      %s677 = int_to_ptr.vmem [resolvable:$true] %s676
      %679 = dma.vmem_to_hbm [thread:$0]  %s677, 16, %s5, [#allocation4]
    $region25: #{tpu_custom_call.1} parent=1 // pred_fallthru
      _
    // Predicated region
    $region26: #{tpu_custom_call.1} parent=1 // pred_check
      _
    $region27: #{tpu_custom_call.1} parent=1 // pred_check_branch
      %681 = sbr.rel (0) target = $region29
    $region28: #{tpu_custom_call.1} parent=1 // pred_region
      %682 = dma.done [#allocation4], 16
    $region29: #{tpu_custom_call.1} parent=1 // pred_fallthru
      _
    %683 = vsyncpa [#allocation4], 1

</llo_original>
